<compile_context>
chip_gen: v5e
topology: v5e:2x2
jax: 0.10.0
libtpu: 0.0.40
codegen_flags: <defaults>
</compile_context>

<pallas_src>
import jax
import jax.numpy as jnp
from jax.experimental import pallas as pl
from jax.experimental.pallas import tpu as pltpu

_LANES = 128
_SUBLANES = 8
_MAX_BLOCK_ROWS = 8192          # (8192, 128) f32 tile = 4 MiB per input per step.
                                # TODO(synk): could go to 16384 on v5e/v6e (128 MiB
                                # VMEM); kept at 8192 so one config also fits v7x.
_CHUNK_ROWS = 1024              # in-kernel sub-slab; bounds live VMEM temporaries
_VMEM_LIMIT_BYTES = 48 * 1024 * 1024
_PALLAS_MIN_ELEMENTS = 16384    # below this, fused XLA beats kernel-launch cost


def _cdiv(a: int, b: int) -> int:
    return (a + b - 1) // b


def _round_up(a: int, b: int) -> int:
    return _cdiv(a, b) * b


def _as_rows(flat: jax.Array, n: int):
    """View flat (n,) as (rows, 128).  Free (no HBM copy) when n % 128 == 0,
    which the default Pallas gate guarantees; zero-pads the last lane row
    otherwise (only reachable via force_pallas on tiny inputs)."""
    rows = _cdiv(n, _LANES)
    padded = rows * _LANES
    if padded != n:
        flat = jnp.pad(flat, (0, padded - n))
    return flat.reshape(rows, _LANES), rows


# ----------------------------------------------------------------------------
# Kernels
# ----------------------------------------------------------------------------
def _make_sse_kernel(block_rows: int, chunk_rows: int, rows_valid: int,
                     steps: int, needs_row_mask: bool):
    """Builds the sum-of-squared-errors accumulation kernel (static config
    baked in via closure)."""
    num_chunks = block_rows // chunk_rows
    groups = chunk_rows // _SUBLANES

    def contrib(row0, p_blk, t_blk):
        d = p_blk.astype(jnp.float32) - t_blk.astype(jnp.float32)
        sq = d * d
        if needs_row_mask:
            # Rows past the true array end (partial last block, or a block
            # duplicated by the clamped index_map) contribute zero.
            rid = jax.lax.broadcasted_iota(jnp.int32, (chunk_rows, _LANES), 0)
            sq = jnp.where(rid + row0 < rows_valid, sq, 0.0)
        # Collapse sublane-tile groups with plain VPU vreg adds (no XLU).
        return sq.reshape(groups, _SUBLANES, _LANES).sum(axis=0)

    def kernel(pred_ref, tgt_ref, out_ref, acc_ref):
        part = pl.program_id(0)
        step = pl.program_id(1)

        @pl.when(step == 0)
        def _():
            acc_ref[...] = jnp.zeros_like(acc_ref)

        # Global row offset of this (possibly duplicated) block.
        base_row = (part * steps + step) * block_rows

        # Static chunk loop: bounds live temporaries to ~1.5 MiB instead of
        # materializing a (block_rows, 128) f32 slab in VMEM.
        acc = jnp.zeros((_SUBLANES, _LANES), jnp.float32)
        for c in range(num_chunks):
            r0 = c * chunk_rows
            acc = acc + contrib(base_row + r0,
                                pred_ref[r0:r0 + chunk_rows, :],
                                tgt_ref[r0:r0 + chunk_rows, :])
        acc_ref[...] += acc

        @pl.when(step == pl.num_programs(1) - 1)
        def _():
            out_ref[...] = acc_ref[...][None]

    return kernel


def _sq_err_kernel(pred_ref, tgt_ref, out_ref):
    """Elementwise squared error (reduction='none'); cast happens in-vreg."""
    d = pred_ref[...].astype(jnp.float32) - tgt_ref[...].astype(jnp.float32)
    out_ref[...] = (d * d).astype(out_ref.dtype)


# ----------------------------------------------------------------------------
# Pallas paths
# ----------------------------------------------------------------------------
def _pallas_sse(pred_flat: jax.Array, tgt_flat: jax.Array, n: int) -> jax.Array:
    """Sum of squared errors via tiled accumulator kernel (no HBM pad copies)."""
    p2d, rows = _as_rows(pred_flat, n)
    t2d, _ = _as_rows(tgt_flat, n)

    # Multiple of 32 keeps the block layout-legal for f32/bf16/int8 inputs.
    block_rows = min(_MAX_BLOCK_ROWS, _round_up(rows, 32))
    nblocks = _cdiv(rows, block_rows)
    num_parts = 2 if nblocks >= 2 else 1      # feeds both TCs on megacore/v7x
    steps = _cdiv(nblocks, num_parts)
    # Mask needed whenever the rectangular (num_parts x steps) grid does not
    # cover exactly `rows` rows (partial last block and/or duplicated block).
    needs_row_mask = (num_parts * steps * block_rows) != rows

    chunk_rows = (_CHUNK_ROWS
                  if (block_rows > _CHUNK_ROWS and block_rows % _CHUNK_ROWS == 0)
                  else block_rows)

    kernel = _make_sse_kernel(block_rows, chunk_rows, rows, steps, needs_row_mask)

    last_block = nblocks - 1
    in_spec = pl.BlockSpec(
        (block_rows, _LANES),
        # Clamp so the grid never DMAs past the array; the kernel masks the
        # duplicated block's contribution to zero.
        lambda p, i: (jnp.minimum(p * steps + i, last_block), 0))
    out_spec = pl.BlockSpec((1, _SUBLANES, _LANES), lambda p, i: (p, 0, 0))

    partials = pl.pallas_call(
        kernel,
        out_shape=jax.ShapeDtypeStruct((num_parts, _SUBLANES, _LANES),
                                       jnp.float32),
        grid=(num_parts, steps),
        in_specs=[in_spec, in_spec],
        out_specs=out_spec,
        scratch_shapes=[pltpu.VMEM((_SUBLANES, _LANES), jnp.float32)],
        # TODO(synk): on v7x confirm in xprof that the leading "parallel" axis
        # really shards across both TensorCores; if not, switch that axis to
        # pltpu.CORE_PARALLEL (kept portable here).
        compiler_params=pltpu.CompilerParams(
            dimension_semantics=("parallel", "arbitrary"),
            vmem_limit_bytes=_VMEM_LIMIT_BYTES),
    )(p2d, t2d)

    # Tiny final cross-lane reduce (num_parts*8*128 values); fuses with the
    # mean division in the wrapper.
    return jnp.sum(partials)


def _pallas_sq_err(pred_flat: jax.Array, tgt_flat: jax.Array,
                   n: int, out_dtype) -> jax.Array:
    """Elementwise squared error; returns a flat (n,) array with no extra
    HBM copies when n % 128 == 0."""
    p2d, rows = _as_rows(pred_flat, n)
    t2d, _ = _as_rows(tgt_flat, n)

    # Full-array block when it fits (always layout-legal); otherwise 8192-row
    # blocks (multiple of 32 -> legal for f32/bf16/int8 outputs).  Partial
    # last blocks are fine: garbage input rows square to garbage values that
    # the output write-back crops.
    block_rows = rows if rows <= _MAX_BLOCK_ROWS else _MAX_BLOCK_ROWS
    nblocks = _cdiv(rows, block_rows)

    spec = pl.BlockSpec((block_rows, _LANES), lambda i: (i, 0))
    out = pl.pallas_call(
        _sq_err_kernel,
        out_shape=jax.ShapeDtypeStruct((rows, _LANES), out_dtype),
        grid=(nblocks,),
        in_specs=[spec, spec],
        out_specs=spec,
        compiler_params=pltpu.CompilerParams(
            dimension_semantics=("parallel",),
            vmem_limit_bytes=_VMEM_LIMIT_BYTES),
    )(p2d, t2d)

    flat = out.reshape(-1)                   # free reshape
    if rows * _LANES != n:                   # only under force_pallas + unaligned n
        flat = flat[:n]
    return flat


# ----------------------------------------------------------------------------
# Public wrapper (DistanceHeadLoss.forward equivalent)
# ----------------------------------------------------------------------------
def distance_head_loss(predictions: jax.Array,
                       targets: jax.Array,
                       reduction: str = "mean",
                       *,
                       force_pallas: bool = False) -> jax.Array:
    """JAX/Pallas equivalent of DistanceHeadLoss.forward (MSE loss)."""
    if predictions.shape != targets.shape:
        raise RuntimeError(
            f"Predictions shape {predictions.shape} does not match "
            f"targets shape {targets.shape}")
    if reduction not in ("none", "mean", "sum"):
        raise ValueError(f"Unsupported reduction: {reduction}")

    out_dtype = jnp.result_type(predictions.dtype, targets.dtype)
    orig_shape = predictions.shape
    p_flat = jnp.reshape(predictions, (-1,))
    t_flat = jnp.reshape(targets, (-1,))
    n = p_flat.shape[0]

    # Pallas only when it can stream with zero extra HBM copies: lane-aligned
    # size and large enough to beat launch overhead.  Unaligned / tiny inputs
    # (the module's typical (B,) usage) go to fused XLA, which already runs at
    # HBM roofline with no padding copies.
    use_pallas = (n > 0) and (
        force_pallas or (n >= _PALLAS_MIN_ELEMENTS and n % _LANES == 0))

    if reduction == "none":
        if use_pallas:
            sq = _pallas_sq_err(p_flat, t_flat, n, out_dtype)
        else:
            d = p_flat.astype(jnp.float32) - t_flat.astype(jnp.float32)
            sq = (d * d).astype(out_dtype)
        return jnp.reshape(sq, orig_shape)

    if use_pallas:
        sse = _pallas_sse(p_flat, t_flat, n)
    else:
        d = p_flat.astype(jnp.float32) - t_flat.astype(jnp.float32)
        sse = jnp.sum(d * d)

    if reduction == "sum":
        return sse.astype(out_dtype)
    return (sse / jnp.float32(n)).astype(out_dtype)     # mean


# ----------------------------------------------------------------------------
# Demo / correctness check
# ----------------------------------------------------------------------------
if __name__ == "__main__":
    key = jax.random.PRNGKey(0)
    ks = jax.random.split(key, 6)

    # --- Small (B,) case matching the module's typical usage. ---------------
    B = 8
    p_s = jax.random.normal(ks[0], (B,), dtype=jnp.float32)
    t_s = jax.random.normal(ks[1], (B,), dtype=jnp.float32)
    ref_s = jnp.mean((p_s - t_s) ** 2)

    # Default path (XLA fast path below the Pallas cutoff).
    out = jax.block_until_ready(distance_head_loss(p_s, t_s, "mean"))
    assert jnp.allclose(out, ref_s, rtol=1e-6, atol=1e-6), (out, ref_s)

    # Forced Pallas path at the same small shape (exercises the kernel,
    # including lane padding + in-kernel row masking).
    out = jax.block_until_ready(
        distance_head_loss(p_s, t_s, "mean", force_pallas=True))
    assert jnp.allclose(out, ref_s, rtol=1e-6, atol=1e-6), (out, ref_s)

    out = jax.block_until_ready(
        distance_head_loss(p_s, t_s, "none", force_pallas=True))
    assert out.shape == (B,)
    assert jnp.allclose(out, (p_s - t_s) ** 2, rtol=1e-6, atol=1e-6)

    out = jax.block_until_ready(
        distance_head_loss(p_s, t_s, "sum", force_pallas=True))
    assert jnp.allclose(out, jnp.sum((p_s - t_s) ** 2), rtol=1e-6, atol=1e-6)

    # --- Lane-aligned case: default Pallas path, multi-block grid with a
    #     partial last block, 2-way parallel split and index-map clamping. ---
    n_odd = (2 * _MAX_BLOCK_ROWS + 1000) * _LANES          # rows = 17384
    p_m = jax.random.normal(ks[2], (n_odd,), dtype=jnp.float32)
    t_m = jax.random.normal(ks[3], (n_odd,), dtype=jnp.float32)
    d_m = p_m - t_m

    out = jax.block_until_ready(distance_head_loss(p_m, t_m, "mean"))
    assert jnp.allclose(out, jnp.mean(d_m ** 2), rtol=1e-5, atol=1e-5)

    out = jax.block_until_ready(distance_head_loss(p_m, t_m, "sum"))
    assert jnp.allclose(out, jnp.sum(d_m ** 2), rtol=1e-5)

    out = jax.block_until_ready(distance_head_loss(p_m, t_m, "none"))
    assert out.shape == (n_odd,)
    assert jnp.allclose(out, d_m ** 2, rtol=1e-6, atol=1e-6)

    # --- Exactly block-divisible case (no masking path) + bf16 inputs
    #     (exercises the in-kernel dtype cast). -------------------------------
    n_even = (2 * _MAX_BLOCK_ROWS) * _LANES                 # rows = 16384
    p_e = jax.random.normal(ks[4], (n_even,), dtype=jnp.float32)
    t_e = jax.random.normal(ks[5], (n_even,), dtype=jnp.float32)
    out = jax.block_until_ready(distance_head_loss(p_e, t_e, "mean"))
    assert jnp.allclose(out, jnp.mean((p_e - t_e) ** 2), rtol=1e-5, atol=1e-5)

    p_b = p_e.astype(jnp.bfloat16)
    t_b = t_e.astype(jnp.bfloat16)
    out_b = jax.block_until_ready(distance_head_loss(p_b, t_b, "mean"))
    ref_b = jnp.mean((p_b.astype(jnp.float32) - t_b.astype(jnp.float32)) ** 2)
    assert jnp.allclose(out_b.astype(jnp.float32), ref_b, rtol=2e-2), (out_b, ref_b)

    print("KERNEL_OK")
</pallas_src>

<mosaic_0001>
module attributes {stable_mosaic.version = 11 : i64} {
  func.func @kernel(%arg0: i32, %arg1: i32, %arg2: memref<32x128xf32, #tpu.memory_space<vmem>>, %arg3: memref<32x128xf32, #tpu.memory_space<vmem>>, %arg4: memref<1x8x128xf32, #tpu.memory_space<vmem>>, %arg5: memref<8x128xf32, #tpu.memory_space<vmem>>) attributes {dimension_semantics = [#tpu.dimension_semantics<parallel>, #tpu.dimension_semantics<arbitrary>], iteration_bounds = array<i64: 1, 1>, scalar_prefetch = 0 : i64, scratch_operands = 1 : i64, tpu.core_type = #tpu.core_type<tc>, window_params = [{transform_indices = @transform_0, window_bounds = array<i64: 32, 128>}, {transform_indices = @transform_1, window_bounds = array<i64: 32, 128>}, {transform_indices = @transform_2, window_bounds = array<i64: 1, 8, 128>}]} {
    %c0_i32 = arith.constant 0 : i32
    %0 = arith.cmpi eq, %arg1, %c0_i32 : i32
    %1 = arith.extui %0 : i1 to i32
    %c0_i32_0 = arith.constant 0 : i32
    %2 = arith.cmpi ne, %1, %c0_i32_0 : i32
    scf.if %2 {
      %cst_14 = arith.constant 0.000000e+00 : f32
      %28 = vector.broadcast %cst_14 : f32 to vector<8x128xf32>
      %c0_15 = arith.constant 0 : index
      %c0_16 = arith.constant 0 : index
      %29 = vector.load %arg5[%c0_15, %c0_16] : memref<8x128xf32, #tpu.memory_space<vmem>>, vector<8x128xf32>
      tpu.vector_store %arg5[%c0_15, %c0_16], %28 {strides = array<i32>} : memref<8x128xf32, #tpu.memory_space<vmem>>, vector<8x128xf32>,
    } else {
    }
    %c1_i32 = arith.constant 1 : i32
    %3 = arith.muli %arg0, %c1_i32 : i32
    %4 = arith.addi %3, %arg1 : i32
    %c32_i32 = arith.constant 32 : i32
    %5 = arith.muli %4, %c32_i32 : i32
    %cst = arith.constant 0.000000e+00 : f32
    %6 = vector.broadcast %cst : f32 to vector<8x128xf32>
    %c0_i32_1 = arith.constant 0 : i32
    %7 = arith.addi %5, %c0_i32_1 : i32
    %c0 = arith.constant 0 : index
    %c0_2 = arith.constant 0 : index
    %8 = vector.load %arg2[%c0, %c0_2] : memref<32x128xf32, #tpu.memory_space<vmem>>, vector<32x128xf32>
    %c0_3 = arith.constant 0 : index
    %c0_4 = arith.constant 0 : index
    %9 = vector.load %arg3[%c0_3, %c0_4] : memref<32x128xf32, #tpu.memory_space<vmem>>, vector<32x128xf32>
    %10 = arith.subf %8, %9 : vector<32x128xf32>
    %11 = arith.mulf %10, %10 : vector<32x128xf32>
    %12 = tpu.iota {dimensions = array<i32: 0>} : vector<32x128xi32>
    %13 = vector.broadcast %7 : i32 to vector<32x128xi32>
    %14 = arith.addi %12, %13 : vector<32x128xi32>
    %c1_i32_5 = arith.constant 1 : i32
    %15 = vector.broadcast %c1_i32_5 : i32 to vector<32x128xi32>
    %16 = arith.cmpi slt, %14, %15 : vector<32x128xi32>
    %cst_6 = arith.constant 0.000000e+00 : f32
    %17 = vector.broadcast %cst_6 : f32 to vector<32x128xf32>
    %18 = arith.select %16, %11, %17 : vector<32x128xi1>, vector<32x128xf32>
    %19 = vector.shape_cast %18 : vector<32x128xf32> to vector<4x8x128xf32>
    %cst_7 = arith.constant dense<0.000000e+00> : vector<8x128xf32>
    %20 = vector.multi_reduction <add>, %19, %cst_7 [0] : vector<4x8x128xf32> to vector<8x128xf32>
    %21 = arith.addf %6, %20 : vector<8x128xf32>
    %c0_8 = arith.constant 0 : index
    %c0_9 = arith.constant 0 : index
    %22 = vector.load %arg5[%c0_8, %c0_9] : memref<8x128xf32, #tpu.memory_space<vmem>>, vector<8x128xf32>
    %23 = arith.addf %22, %21 : vector<8x128xf32>
    %c0_10 = arith.constant 0 : index
    %c0_11 = arith.constant 0 : index
    %24 = vector.load %arg5[%c0_10, %c0_11] : memref<8x128xf32, #tpu.memory_space<vmem>>, vector<8x128xf32>
    tpu.vector_store %arg5[%c0_10, %c0_11], %23 {strides = array<i32>} : memref<8x128xf32, #tpu.memory_space<vmem>>, vector<8x128xf32>,
    %c0_i32_12 = arith.constant 0 : i32
    %25 = arith.cmpi eq, %arg1, %c0_i32_12 : i32
    %26 = arith.extui %25 : i1 to i32
    %c0_i32_13 = arith.constant 0 : i32
    %27 = arith.cmpi ne, %26, %c0_i32_13 : i32
    scf.if %27 {
      %c0_14 = arith.constant 0 : index
      %c0_15 = arith.constant 0 : index
      %28 = vector.load %arg5[%c0_14, %c0_15] : memref<8x128xf32, #tpu.memory_space<vmem>>, vector<8x128xf32>
      %29 = vector.shape_cast %28 : vector<8x128xf32> to vector<1x8x128xf32>
      %c0_16 = arith.constant 0 : index
      %c0_17 = arith.constant 0 : index
      %c0_18 = arith.constant 0 : index
      %30 = vector.load %arg4[%c0_16, %c0_17, %c0_18] : memref<1x8x128xf32, #tpu.memory_space<vmem>>, vector<1x8x128xf32>
      tpu.vector_store %arg4[%c0_16, %c0_17, %c0_18], %29 {strides = array<i32>} : memref<1x8x128xf32, #tpu.memory_space<vmem>>, vector<1x8x128xf32>,
    } else {
    }
    return
  }
  func.func @transform_0(%arg0: i32, %arg1: i32) -> (i32, i32) {
    %c1_i32 = arith.constant 1 : i32
    %0 = arith.muli %arg0, %c1_i32 : i32
    %1 = arith.addi %0, %arg1 : i32
    %c0_i32 = arith.constant 0 : i32
    %2 = arith.minsi %1, %c0_i32 : i32
    %c0_i32_0 = arith.constant 0 : i32
    %c0_i32_1 = arith.constant 0 : i32
    return %2, %c0_i32_0 : i32, i32
  }
  func.func @transform_1(%arg0: i32, %arg1: i32) -> (i32, i32) {
    %c1_i32 = arith.constant 1 : i32
    %0 = arith.muli %arg0, %c1_i32 : i32
    %1 = arith.addi %0, %arg1 : i32
    %c0_i32 = arith.constant 0 : i32
    %2 = arith.minsi %1, %c0_i32 : i32
    %c0_i32_0 = arith.constant 0 : i32
    %c0_i32_1 = arith.constant 0 : i32
    return %2, %c0_i32_0 : i32, i32
  }
  func.func @transform_2(%arg0: i32, %arg1: i32) -> (i32, i32, i32) {
    %c0_i32 = arith.constant 0 : i32
    %c0_i32_0 = arith.constant 0 : i32
    %c0_i32_1 = arith.constant 0 : i32
    return %arg0, %c0_i32, %c0_i32_0 : i32, i32, i32
  }
}

</mosaic_0001>

<llo_original>
// kernel: tpu_custom_call.1
$region0: #{tpu_custom_call.1}
  #allocation0 [shape = 'u32[]', space=smem, size = 0x4, offset = 0x4, fixed_abs, tag = 'smem constant byte address 0x4 - core index']
  #allocation1 [shape = 'u32[72,128]{1,0:T(1,128)}', space=vmem, size = 0x9000, scoped, tag = 'internal scratch']
  #allocation2 [shape = 'f32[8,128]{1,0:T(8,128)}', space=vmem, size = 0x1000, scoped, tag = 'scratch operand']
  %s0 = inlined_call_operand.hbm [shape: f32[1,128], index: 0, kind: input, shape index: {}]
  %s1 = inlined_call_operand.hbm [shape: f32[1,128], index: 1, kind: input, shape index: {}]
  %s2 = inlined_call_operand.hbm [shape: f32[1,8,128], index: 2, kind: output, shape index: {}]
  %s3 = sld [smem:[#allocation0]]
  $region34: #{tpu_custom_call.1} parent=0
    _
  %s5 = ssub.s32 1, %s3
  %s6 = scalar_select 0, %s5, %s3
  $region1: #{tpu_custom_call.1} parent=0
    #allocation3 [shape = 'u8[16384]{0}', space=vmem, size = 0x4000, scoped, tag = 'input window, operand 0, single buffered']
    #allocation4 [shape = 's32[1]{0}', space=sflag, size = 0x4, scoped, tag = 'scoped memory for tpu_custom_call.1']
    #allocation5 [shape = 's32[1]{0}', space=sflag, size = 0x4, scoped, tag = 'scoped memory for tpu_custom_call.1']
    #allocation6 [shape = 'u8[16384]{0}', space=vmem, size = 0x4000, scoped, tag = 'input window, operand 1, single buffered']
    #allocation7 [shape = 's32[1]{0}', space=sflag, size = 0x4, scoped, tag = 'scoped memory for tpu_custom_call.1']
    #allocation8 [shape = 'u8[4096]{0}', space=vmem, size = 0x1000, scoped, tag = 'output window, operand 0, single buffered']
    %7 = vsyncpa [#allocation4], 0
    %8 = vsyncpa [#allocation7], 0
    %9 = vsyncpa [#allocation5], 0
    // Predicated region
    $region2: #{tpu_custom_call.1} parent=1 // pred_check
      _
    $region3: #{tpu_custom_call.1} parent=1 // pred_check_branch
      %11 = sbr.rel (0) target = $region5
    $region4: #{tpu_custom_call.1} parent=1 // pred_region
      %s12 = sadd.s32 0, 0
      %p13 = scmp.lt.s32.totalorder %s12, 0
      %s14 = scalar_select %p13, %s12, 0
      %s15 = smul.u32 32, %s14
      %s16 = ssub.s32 1, %s15
      %s17 = ssub.s32 32, %s16
      %s18 = sshll.u32 %s17, 4
      %19 = vsyncadd [#allocation4], %s18
      %p20 = scmp.ne.s32.totalorder 0, %s16
      %s21 = scalar_lea.hbm %s0, %s15
      %s22 = sshll.u32 %s21, 4
      %s23 = int_to_ptr.hbm [resolvable:$true] %s22
      %s24 = sshll.u32 [#allocation3], 4
      %s25 = int_to_ptr.vmem [resolvable:$true] %s24
      %s26 = sshll.u32 %s16, 4
      %30 = dma.hbm_to_vmem [thread:$0]  (%p20), %s23, %s26, %s25, [#allocation4], 16, 16, 1
    $region5: #{tpu_custom_call.1} parent=1 // pred_fallthru
      _
    // Predicated region
    $region6: #{tpu_custom_call.1} parent=1 // pred_check
      _
    $region7: #{tpu_custom_call.1} parent=1 // pred_check_branch
      %32 = sbr.rel (0) target = $region9
    $region8: #{tpu_custom_call.1} parent=1 // pred_region
      %s33 = sadd.s32 0, 0
      %p34 = scmp.lt.s32.totalorder %s33, 0
      %s35 = scalar_select %p34, %s33, 0
      %s36 = smul.u32 32, %s35
      %s37 = ssub.s32 1, %s36
      %s38 = ssub.s32 32, %s37
      %s39 = sshll.u32 %s38, 4
      %40 = vsyncadd [#allocation7], %s39
      %p41 = scmp.ne.s32.totalorder 0, %s37
      %s42 = scalar_lea.hbm %s1, %s36
      %s43 = sshll.u32 %s42, 4
      %s44 = int_to_ptr.hbm [resolvable:$true] %s43
      %s45 = sshll.u32 [#allocation6], 4
      %s46 = int_to_ptr.vmem [resolvable:$true] %s45
      %s47 = sshll.u32 %s37, 4
      %51 = dma.hbm_to_vmem [thread:$0]  (%p41), %s44, %s47, %s46, [#allocation7], 16, 16, 1
    $region9: #{tpu_custom_call.1} parent=1 // pred_fallthru
      _
    // Predicated region
    $region10: #{tpu_custom_call.1} parent=1 // pred_check
      _
    $region11: #{tpu_custom_call.1} parent=1 // pred_check_branch
      %53 = sbr.rel (0) target = $region13
    $region12: #{tpu_custom_call.1} parent=1 // pred_region
      %55 = dma.done [#allocation4], 512
    $region13: #{tpu_custom_call.1} parent=1 // pred_fallthru
      _
    // Predicated region
    $region14: #{tpu_custom_call.1} parent=1 // pred_check
      _
    $region15: #{tpu_custom_call.1} parent=1 // pred_check_branch
      %57 = sbr.rel (0) target = $region17
    $region16: #{tpu_custom_call.1} parent=1 // pred_region
      %59 = dma.done [#allocation7], 512
    $region17: #{tpu_custom_call.1} parent=1 // pred_fallthru
      _
    %s60 = sadd.s32 0, 0
    %p61 = scmp.lt.s32.totalorder %s60, 0
    %s62 = scalar_select %p61, %s60, 0
    %s63 = smul.u32 32, %s62
    %s64 = ssub.s32 1, %s63
    %s65 = sadd.s32 0, 0
    %p66 = scmp.lt.s32.totalorder %s65, 0
    %s67 = scalar_select %p66, %s65, 0
    %s68 = smul.u32 32, %s67
    %s69 = ssub.s32 1, %s68
    %p70 = scmp.eq.s32.totalorder 0, 0
    // Predicated region
    $region18: #{tpu_custom_call.1} parent=1 // pred_check
      %p71 = pneg %p70
    $region19: #{tpu_custom_call.1} parent=1 // pred_check_branch
      %73 = sbr.rel (%p71) target = $region21
    $region20: #{tpu_custom_call.1} parent=1 // pred_region
      %74 = vst [vmem:[#allocation2] sm:$0xff] 0.0
    $region21: #{tpu_custom_call.1} parent=1 // pred_fallthru
      _
    %s75 = sadd.s32 0, 0
    %s76 = smul.u32 %s75, 32
    %v77 = vld [vmem:[#allocation3] sm:$0xff]
    %v78 = vld [vmem:[#allocation3 + $0x8] sm:$0xff]
    %v79 = vld [vmem:[#allocation3 + $0x10] sm:$0xff]
    %v80 = vld [vmem:[#allocation3 + $0x18] sm:$0xff]
    %v81 = vld [vmem:[#allocation6] sm:$0xff]
    %v82 = vld [vmem:[#allocation6 + $0x8] sm:$0xff]
    %v83 = vld [vmem:[#allocation6 + $0x10] sm:$0xff]
    %v84 = vld [vmem:[#allocation6 + $0x18] sm:$0xff]
    %v85 = vsub.f32 %v77, %v81
    %v86 = vsub.f32 %v78, %v82
    %v87 = vsub.f32 %v79, %v83
    %v88 = vsub.f32 %v80, %v84
    %v89 = vmul.f32 %v85, %v85
    %v90 = vmul.f32 %v86, %v86
    %v91 = vmul.f32 %v87, %v87
    %v92 = vmul.f32 %v88, %v88
    %v93 = vlaneseq
    %v94 = vshrl.u32 %v93, 7
    %v95 = vadd.s32 %v94, 8
    %v96 = vadd.s32 %v94, 16
    %v97 = vadd.s32 %v94, 24
    %v98 = vstv %s76
    %v99 = vadd.s32 %v94, %v98
    %v100 = vadd.s32 %v95, %v98
    %v101 = vadd.s32 %v96, %v98
    %v102 = vadd.s32 %v97, %v98
    %vm103 = vcmp.lt.s32.totalorder %v99, 1
    %vm104 = vcmp.lt.s32.totalorder %v100, 1
    %vm105 = vcmp.lt.s32.totalorder %v101, 1
    %vm106 = vcmp.lt.s32.totalorder %v102, 1
    %v107 = vsel %vm103, %v89, 0.0
    %v108 = vsel %vm104, %v90, 0.0
    %v109 = vsel %vm105, %v91, 0.0
    %v110 = vsel %vm106, %v92, 0.0
    %v111 = vadd.f32 %v107, %v108
    %v112 = vadd.f32 %v111, %v109
    %v113 = vadd.f32 %v112, %v110
    %v114 = vadd.f32 %v113, 0.0
    %v115 = vld [vmem:[#allocation2] sm:$0xff]
    %v116 = vadd.f32 %v115, %v114
    %117 = vst [vmem:[#allocation2] sm:$0xff] %v116
    // Predicated region
    $region22: #{tpu_custom_call.1} parent=1 // pred_check
      %p118 = pneg %p70
    $region23: #{tpu_custom_call.1} parent=1 // pred_check_branch
      %120 = sbr.rel (%p118) target = $region25
    $region24: #{tpu_custom_call.1} parent=1 // pred_region
      %v121 = vld [vmem:[#allocation2] sm:$0xff]
      %122 = vst [vmem:[#allocation8] sm:$0xff] %v121
    $region25: #{tpu_custom_call.1} parent=1 // pred_fallthru
      _
    // Predicated region
    $region26: #{tpu_custom_call.1} parent=1 // pred_check
      _
    $region27: #{tpu_custom_call.1} parent=1 // pred_check_branch
      %124 = sbr.rel (0) target = $region29
    $region28: #{tpu_custom_call.1} parent=1 // pred_region
      %126 = vsyncadd [#allocation5], 0
      %s128 = sshll.u32 [#allocation8], 4
      %s129 = int_to_ptr.vmem [resolvable:$true] %s128
      %s130 = sshll.u32 %s2, 4
      %s131 = int_to_ptr.hbm [resolvable:$true] %s130
      %133 = dma.vmem_to_hbm [thread:$0]  %s129, 128, %s131, [#allocation5]
    $region29: #{tpu_custom_call.1} parent=1 // pred_fallthru
      _
    // Predicated region
    $region30: #{tpu_custom_call.1} parent=1 // pred_check
      _
    $region31: #{tpu_custom_call.1} parent=1 // pred_check_branch
      %135 = sbr.rel (0) target = $region33
    $region32: #{tpu_custom_call.1} parent=1 // pred_region
      %137 = dma.done [#allocation5], 128
    $region33: #{tpu_custom_call.1} parent=1 // pred_fallthru
      _
    %138 = vsyncpa [#allocation4], 1
    %139 = vsyncpa [#allocation7], 1
    %140 = vsyncpa [#allocation5], 1

</llo_original>
